<compile_context>
chip_gen: v6e
topology: v6e:2x2x1
jax: 0.10.0
libtpu: 0.0.40
codegen_flags: <defaults>
</compile_context>

<pallas_src>
import functools

import jax
import jax.numpy as jnp
import numpy as np
from jax.experimental import pallas as pl
from jax.experimental.pallas import tpu as pltpu

N_DEGS = 4
TILE_E_MAX = 2048      # edges per grid step (lane axis); multiple of 128
LANE = 128
NUM_CORE_SPLITS = 2    # leading parallel axis -> both TCs on v7x; harmless on v5e/v6e


def _round_up(x, m):
    return ((x + m - 1) // m) * m


def _polynomial_kernel(slab_ref, out_ref, *, n_degs):
    """slab_ref: (n_rows_pad, tile_e) f32 packed rows:
         rows [0 : n_degs]   k_1 .. k_{n_degs} per edge
         row  n_degs         x (feature) per edge
         row  n_degs + 1     v_0 per edge
         row  n_degs + 2     mapping_batch (int32 bit pattern stored as f32)
       out_ref: (8, b_pad) f32; row 0 is the per-structure energy accumulator,
       resident across the reduction (last) grid axis."""
    @pl.when(pl.program_id(1) == 0)
    def _():
        out_ref[...] = jnp.zeros_like(out_ref)

    tile_e = slab_ref.shape[1]
    b_pad = out_ref.shape[1]

    x = slab_ref[n_degs:n_degs + 1, :]                                  # (1, E)
    v0 = slab_ref[n_degs + 1:n_degs + 2, :]                             # (1, E)
    bidx = pltpu.bitcast(slab_ref[n_degs + 2:n_degs + 3, :], jnp.int32)  # (1, E)

    # Horner: V = (((k_n x + k_{n-1}) x + ...) x + k_1) x + v_0
    v = slab_ref[n_degs - 1:n_degs, :]
    for p in range(n_degs - 2, -1, -1):
        v = v * x + slab_ref[p:p + 1, :]
    v = v * x + v0                                                      # (1, E)

    # scatter-sum over mapping_batch as a one-hot matmul on the MXU into a
    # lane-dense (1, b_pad) accumulator.  Padded edges carry v == 0 and a batch
    # id that is sliced away (or out of range) in the wrapper.
    rows = jax.lax.broadcasted_iota(jnp.int32, (b_pad, tile_e), 0)
    one_hot = (rows == bidx).astype(jnp.float32)                        # (b_pad, E)
    acc = jnp.dot(v, one_hot.T, preferred_element_type=jnp.float32)     # (1, b_pad)
    out_ref[0:1, :] = out_ref[0:1, :] + acc


def polynomial_energy(x, ks_edge, v0_edge, mapping_batch, n_batch):
    """x: (E,) f32 features; ks_edge: (n_degs, E); v0_edge: (E,);
    mapping_batch: (E,) int in [0, n_batch).  Returns (n_batch,) energies."""
    e = int(x.shape[0])
    n_degs = int(ks_edge.shape[0])

    tile_e = min(TILE_E_MAX, _round_up(max(e, 1), LANE))
    total_tiles = pl.cdiv(e, tile_e)
    num_splits = NUM_CORE_SPLITS if total_tiles >= NUM_CORE_SPLITS else 1
    tiles_per_split = pl.cdiv(total_tiles, num_splits)
    e_pad = num_splits * tiles_per_split * tile_e
    pad = e_pad - e

    n_rows = n_degs + 3
    n_rows_pad = _round_up(n_rows, 8)
    b_pad = _round_up(n_batch, LANE)

    # Pack all per-edge streams into one (n_rows_pad, e_pad) f32 slab:
    # one fully-packed DMA per grid step.
    ksp = jnp.pad(ks_edge.astype(jnp.float32), ((0, 0), (0, pad)))
    xp = jnp.pad(x.astype(jnp.float32), (0, pad))[None, :]
    v0p = jnp.pad(v0_edge.astype(jnp.float32), (0, pad))[None, :]
    bid = jnp.pad(mapping_batch.astype(jnp.int32), (0, pad),
                  constant_values=n_batch)         # padded edges: out-of-range id
    bidf = jax.lax.bitcast_convert_type(bid, jnp.float32)[None, :]
    fill = jnp.zeros((n_rows_pad - n_rows, e_pad), jnp.float32)
    slab = jnp.concatenate([ksp, xp, v0p, bidf, fill], axis=0)

    kernel = functools.partial(_polynomial_kernel, n_degs=n_degs)
    out = pl.pallas_call(
        kernel,
        out_shape=jax.ShapeDtypeStruct((num_splits * 8, b_pad), jnp.float32),
        grid=(num_splits, tiles_per_split),
        in_specs=[
            pl.BlockSpec((n_rows_pad, tile_e),
                         lambda c, j, T=tiles_per_split: (0, c * T + j)),
        ],
        out_specs=pl.BlockSpec((8, b_pad), lambda c, j: (c, 0)),
        compiler_params=pltpu.CompilerParams(
            dimension_semantics=("parallel", "arbitrary")),
    )(slab)

    # Combine the per-split partial sums (row 0 of each 8-row group).
    out = out.reshape(num_splits, 8, b_pad)[:, 0, :]   # (num_splits, b_pad)
    return jnp.sum(out, axis=0)[:n_batch]


# --------------------------- plain-JAX glue ---------------------------------

def compute_distances(pos, mapping):
    """bonds feature: Euclidean distance per pair (order-2 mapping)."""
    d = pos[mapping[1]] - pos[mapping[0]]
    return jnp.sqrt(jnp.sum(d * d, axis=-1))


def polynomial_forward(pos, mapping, atom_types, mapping_batch,
                       ks_table, v0_table, n_batch):
    """Equivalent of Polynomial.forward for name='bonds' (order=2)."""
    # data2features(...).flatten()
    x = compute_distances(pos, mapping)                       # (E,)
    # data2parameters: gather per-edge coefficients from the type tables
    t0 = atom_types[mapping[0]]
    t1 = atom_types[mapping[1]]
    ks_edge = ks_table[:, t0, t1]                              # (n_degs, E)
    v0_edge = v0_table[t0, t1]                                 # (E,)
    # Polynomial.compute + scatter(sum)  -> Pallas kernel
    return polynomial_energy(x, ks_edge, v0_edge, mapping_batch, n_batch)


def reference_forward(pos, mapping, atom_types, mapping_batch,
                      ks_table, v0_table, n_batch):
    x = compute_distances(pos, mapping)
    t0 = atom_types[mapping[0]]
    t1 = atom_types[mapping[1]]
    ks_edge = ks_table[:, t0, t1]
    v0_edge = v0_table[t0, t1]
    v = ks_edge[0] * x
    for p in range(2, ks_edge.shape[0] + 1):
        v = v + ks_edge[p - 1] * x ** p
    v = v + v0_edge
    return jax.ops.segment_sum(v, mapping_batch, num_segments=n_batch)


if __name__ == "__main__":
    key = jax.random.PRNGKey(0)
    k_pos, k_types, k_ks, k_v0 = jax.random.split(key, 4)

    # synthetic "statistics": polynomial prior for bonds (order=2), 3 bead types
    n_types = 3
    ks_table = jax.random.normal(k_ks, (N_DEGS, n_types, n_types),
                                 dtype=jnp.float32) * 0.5   # buffer 'ks'
    v0_table = jax.random.normal(k_v0, (n_types, n_types),
                                 dtype=jnp.float32)          # buffer 'v_0'

    # two structures (batch=2), 9 atoms each, chain bonds (8 bonds per structure)
    n_batch = 2
    atoms_per_mol = 9
    n_atoms = n_batch * atoms_per_mol
    pos = jax.random.normal(k_pos, (n_atoms, 3), dtype=jnp.float32)
    atom_types = jax.random.randint(k_types, (n_atoms,), 0, n_types, dtype=jnp.int32)

    src, dst, mb = [], [], []
    for b in range(n_batch):
        base = b * atoms_per_mol
        for i in range(atoms_per_mol - 1):
            src.append(base + i)
            dst.append(base + i + 1)
            mb.append(b)
    mapping = jnp.array([src, dst], dtype=jnp.int32)          # (2, E), E = 16
    mapping_batch = jnp.array(mb, dtype=jnp.int32)            # (E,)

    energy = polynomial_forward(pos, mapping, atom_types, mapping_batch,
                                ks_table, v0_table, n_batch)
    energy = jax.block_until_ready(energy)

    ref = jax.block_until_ready(
        reference_forward(pos, mapping, atom_types, mapping_batch,
                          ks_table, v0_table, n_batch))

    np.testing.assert_allclose(np.asarray(energy), np.asarray(ref),
                               rtol=1e-5, atol=1e-5)
    print("KERNEL_OK")
</pallas_src>

<mosaic_0001>
module attributes {stable_mosaic.version = 11 : i64} {
  func.func @_polynomial_kernel(%arg0: i32, %arg1: i32, %arg2: memref<8x128xf32, #tpu.memory_space<vmem>>, %arg3: memref<8x128xf32, #tpu.memory_space<vmem>>) attributes {dimension_semantics = [#tpu.dimension_semantics<parallel>, #tpu.dimension_semantics<arbitrary>], iteration_bounds = array<i64: 1, 1>, scalar_prefetch = 0 : i64, scratch_operands = 0 : i64, tpu.core_type = #tpu.core_type<tc>, window_params = [{transform_indices = @transform_0, window_bounds = array<i64: 8, 128>}, {transform_indices = @transform_1, window_bounds = array<i64: 8, 128>}]} {
    %c0_i32 = arith.constant 0 : i32
    %0 = arith.cmpi eq, %arg1, %c0_i32 : i32
    %1 = arith.extui %0 : i1 to i32
    %c0_i32_0 = arith.constant 0 : i32
    %2 = arith.cmpi ne, %1, %c0_i32_0 : i32
    scf.if %2 {
      %cst_12 = arith.constant 0.000000e+00 : f32
      %29 = vector.broadcast %cst_12 : f32 to vector<8x128xf32>
      %c0_13 = arith.constant 0 : index
      %c0_14 = arith.constant 0 : index
      %30 = vector.load %arg3[%c0_13, %c0_14] : memref<8x128xf32, #tpu.memory_space<vmem>>, vector<8x128xf32>
      tpu.vector_store %arg3[%c0_13, %c0_14], %29 {strides = array<i32>} : memref<8x128xf32, #tpu.memory_space<vmem>>, vector<8x128xf32>,
    } else {
    }
    %c4 = arith.constant 4 : index
    %c0 = arith.constant 0 : index
    %3 = vector.load %arg2[%c4, %c0] : memref<8x128xf32, #tpu.memory_space<vmem>>, vector<1x128xf32>
    %c5 = arith.constant 5 : index
    %c0_1 = arith.constant 0 : index
    %4 = vector.load %arg2[%c5, %c0_1] : memref<8x128xf32, #tpu.memory_space<vmem>>, vector<1x128xf32>
    %c6 = arith.constant 6 : index
    %c0_2 = arith.constant 0 : index
    %5 = vector.load %arg2[%c6, %c0_2] : memref<8x128xf32, #tpu.memory_space<vmem>>, vector<1x128xf32>
    %6 = tpu.bitcast %5 : vector<1x128xf32> -> vector<1x128xi32>
    %c3 = arith.constant 3 : index
    %c0_3 = arith.constant 0 : index
    %7 = vector.load %arg2[%c3, %c0_3] : memref<8x128xf32, #tpu.memory_space<vmem>>, vector<1x128xf32>
    %8 = arith.mulf %7, %3 : vector<1x128xf32>
    %c2 = arith.constant 2 : index
    %c0_4 = arith.constant 0 : index
    %9 = vector.load %arg2[%c2, %c0_4] : memref<8x128xf32, #tpu.memory_space<vmem>>, vector<1x128xf32>
    %10 = arith.addf %8, %9 : vector<1x128xf32>
    %11 = arith.mulf %10, %3 : vector<1x128xf32>
    %c1 = arith.constant 1 : index
    %c0_5 = arith.constant 0 : index
    %12 = vector.load %arg2[%c1, %c0_5] : memref<8x128xf32, #tpu.memory_space<vmem>>, vector<1x128xf32>
    %13 = arith.addf %11, %12 : vector<1x128xf32>
    %14 = arith.mulf %13, %3 : vector<1x128xf32>
    %c0_6 = arith.constant 0 : index
    %c0_7 = arith.constant 0 : index
    %15 = vector.load %arg2[%c0_6, %c0_7] : memref<8x128xf32, #tpu.memory_space<vmem>>, vector<1x128xf32>
    %16 = arith.addf %14, %15 : vector<1x128xf32>
    %17 = arith.mulf %16, %3 : vector<1x128xf32>
    %18 = arith.addf %17, %4 : vector<1x128xf32>
    %19 = tpu.iota {dimensions = array<i32: 0>} : vector<128x128xi32>
    %20 = vector.broadcast %6 : vector<1x128xi32> to vector<128x128xi32>
    %21 = arith.cmpi eq, %19, %20 : vector<128x128xi32>
    %22 = arith.extui %21 : vector<128x128xi1> to vector<128x128xi32>
    %23 = arith.sitofp %22 : vector<128x128xi32> to vector<128x128xf32>
    %24 = tpu.transpose %23, [1, 0] : vector<128x128xf32> -> vector<128x128xf32>
    %cst = arith.constant dense<0.000000e+00> : vector<1x128xf32>
    %25 = tpu.matmul %18, %24, %cst {dimension_numbers = #tpu.dot_dimension_numbers<[1], [0], [0], [1], [0, 0, 1, 1], [], []>} : vector<1x128xf32>, vector<128x128xf32>, vector<1x128xf32> -> vector<1x128xf32>
    %c0_8 = arith.constant 0 : index
    %c0_9 = arith.constant 0 : index
    %26 = vector.load %arg3[%c0_8, %c0_9] : memref<8x128xf32, #tpu.memory_space<vmem>>, vector<1x128xf32>
    %27 = arith.addf %26, %25 : vector<1x128xf32>
    %c0_10 = arith.constant 0 : index
    %c0_11 = arith.constant 0 : index
    %28 = vector.load %arg3[%c0_10, %c0_11] : memref<8x128xf32, #tpu.memory_space<vmem>>, vector<1x128xf32>
    tpu.vector_store %arg3[%c0_10, %c0_11], %27 {strides = array<i32>} : memref<8x128xf32, #tpu.memory_space<vmem>>, vector<1x128xf32>,
    return
  }
  func.func @transform_0(%arg0: i32, %arg1: i32) -> (i32, i32) {
    %c1_i32 = arith.constant 1 : i32
    %0 = arith.muli %arg0, %c1_i32 : i32
    %1 = arith.addi %0, %arg1 : i32
    %c0_i32 = arith.constant 0 : i32
    %c0_i32_0 = arith.constant 0 : i32
    return %c0_i32, %1 : i32, i32
  }
  func.func @transform_1(%arg0: i32, %arg1: i32) -> (i32, i32) {
    %c0_i32 = arith.constant 0 : i32
    %c0_i32_0 = arith.constant 0 : i32
    return %arg0, %c0_i32 : i32, i32
  }
}

</mosaic_0001>

<llo_original>
// kernel: tpu_custom_call.1
$region0: #{tpu_custom_call.1}
  #allocation0 [shape = 'u32[]', space=smem, size = 0x4, offset = 0x4, fixed_abs, tag = 'smem constant byte address 0x4 - core index']
  #allocation1 [shape = 'u32[144,128]{1,0:T(1,128)}', space=vmem, size = 0x12000, scoped, tag = 'internal scratch']
  %s0 = inlined_call_operand.hbm [shape: f32[8,128], index: 0, kind: input, shape index: {}]
  %s1 = inlined_call_operand.hbm [shape: f32[8,128], index: 1, kind: output, shape index: {}]
  %s2 = sld [smem:[#allocation0]]
  $region22: #{tpu_custom_call.1} parent=0
    _
  %s4 = ssub.s32 1, %s2
  %s5 = scalar_select 0, %s4, %s2
  $region1: #{tpu_custom_call.1} parent=0
    #allocation2 [shape = 'u8[4096]{0}', space=vmem, size = 0x1000, scoped, tag = 'input window, operand 0, single buffered']
    #allocation3 [shape = 's32[1]{0}', space=sflag, size = 0x4, scoped, tag = 'scoped memory for tpu_custom_call.1']
    #allocation4 [shape = 's32[1]{0}', space=sflag, size = 0x4, scoped, tag = 'scoped memory for tpu_custom_call.1']
    #allocation5 [shape = 'u8[4096]{0}', space=vmem, size = 0x1000, scoped, tag = 'output window, operand 0, single buffered']
    %6 = vsyncpa [#allocation3], 0
    %7 = vsyncpa [#allocation4], 0
    // Predicated region
    $region2: #{tpu_custom_call.1} parent=1 // pred_check
      _
    $region3: #{tpu_custom_call.1} parent=1 // pred_check_branch
      %9 = sbr.rel (0) target = $region5
    $region4: #{tpu_custom_call.1} parent=1 // pred_region
      %s10 = sadd.s32 0, 0
      %s12 = ssub.s32 128, 128
      %13 = vsyncadd [#allocation3], %s12
      %s14 = smul.addr %s10, 128
      %s15 = scalar_lea.hbm %s0, %s14
      %s17 = sshll.u32 [#allocation2], 4
      %s18 = int_to_ptr.vmem [resolvable:$true] %s17
      %20 = dma.hbm_to_vmem [thread:$0]  %s15, 128, %s18, [#allocation3]
    $region5: #{tpu_custom_call.1} parent=1 // pred_fallthru
      _
    // Predicated region
    $region6: #{tpu_custom_call.1} parent=1 // pred_check
      _
    $region7: #{tpu_custom_call.1} parent=1 // pred_check_branch
      %22 = sbr.rel (0) target = $region9
    $region8: #{tpu_custom_call.1} parent=1 // pred_region
      %23 = dma.done [#allocation3], 128
    $region9: #{tpu_custom_call.1} parent=1 // pred_fallthru
      _
    %s24 = sadd.s32 0, 0
    %p25 = scmp.eq.s32.totalorder 0, 0
    // Predicated region
    $region10: #{tpu_custom_call.1} parent=1 // pred_check
      %p26 = pneg %p25
    $region11: #{tpu_custom_call.1} parent=1 // pred_check_branch
      %28 = sbr.rel (%p26) target = $region13
    $region12: #{tpu_custom_call.1} parent=1 // pred_region
      %29 = vst [vmem:[#allocation5] sm:$0xff] 0.0
    $region13: #{tpu_custom_call.1} parent=1 // pred_fallthru
      _
    %v30 = vld [vmem:[#allocation2 + $0x4] sm:$0x1]
    %v31 = vld [vmem:[#allocation2 + $0x5] sm:$0x1]
    %v32 = vld [vmem:[#allocation2 + $0x6] sm:$0x1]
    %v34 = vld [vmem:[#allocation2 + $0x3] sm:$0x1]
    %v35 = vmul.f32 %v34, %v30
    %v36 = vld [vmem:[#allocation2 + $0x2] sm:$0x1]
    %v37 = vadd.f32 %v35, %v36
    %v38 = vmul.f32 %v37, %v30
    %v39 = vld [vmem:[#allocation2 + $0x1] sm:$0x1]
    %v40 = vadd.f32 %v38, %v39
    %v41 = vmul.f32 %v40, %v30
    %v42 = vld [vmem:[#allocation2] sm:$0x1]
    %v43 = vadd.f32 %v41, %v42
    %v44 = vmul.f32 %v43, %v30
    %v45 = vadd.f32 %v44, %v31
    %v46 = vlaneseq
    %v47 = vshrl.u32 %v46, 7
    %v48 = vadd.s32 %v47, 8
    %v49 = vadd.s32 %v47, 16
    %v50 = vadd.s32 %v47, 24
    %v51 = vadd.s32 %v47, 32
    %v52 = vadd.s32 %v47, 40
    %v53 = vadd.s32 %v47, 48
    %v54 = vadd.s32 %v47, 56
    %v55 = vadd.s32 %v47, 64
    %v56 = vadd.s32 %v47, 72
    %v57 = vadd.s32 %v47, 80
    %v58 = vadd.s32 %v47, 88
    %v59 = vadd.s32 %v47, 96
    %v60 = vadd.s32 %v47, 104
    %v61 = vadd.s32 %v47, 112
    %v62 = vadd.s32 %v47, 120
    %v63 = vlaneseq
    %v64 = vshrl.u32 %v63, 7
    %v65 = vsub.s32 0, %v64
    %v66 = vrot.slane %v32, %v65
    %vm67 = vcmp.eq.s32.totalorder %v47, %v66
    %vm68 = vcmp.eq.s32.totalorder %v48, %v66
    %vm69 = vcmp.eq.s32.totalorder %v49, %v66
    %vm70 = vcmp.eq.s32.totalorder %v50, %v66
    %vm71 = vcmp.eq.s32.totalorder %v51, %v66
    %vm72 = vcmp.eq.s32.totalorder %v52, %v66
    %vm73 = vcmp.eq.s32.totalorder %v53, %v66
    %vm74 = vcmp.eq.s32.totalorder %v54, %v66
    %vm75 = vcmp.eq.s32.totalorder %v55, %v66
    %vm76 = vcmp.eq.s32.totalorder %v56, %v66
    %vm77 = vcmp.eq.s32.totalorder %v57, %v66
    %vm78 = vcmp.eq.s32.totalorder %v58, %v66
    %vm79 = vcmp.eq.s32.totalorder %v59, %v66
    %vm80 = vcmp.eq.s32.totalorder %v60, %v66
    %vm81 = vcmp.eq.s32.totalorder %v61, %v66
    %vm82 = vcmp.eq.s32.totalorder %v62, %v66
    %v83 = vsel %vm67, 1, 0
    %v84 = vsel %vm68, 1, 0
    %v85 = vsel %vm69, 1, 0
    %v86 = vsel %vm70, 1, 0
    %v87 = vsel %vm71, 1, 0
    %v88 = vsel %vm72, 1, 0
    %v89 = vsel %vm73, 1, 0
    %v90 = vsel %vm74, 1, 0
    %v91 = vsel %vm75, 1, 0
    %v92 = vsel %vm76, 1, 0
    %v93 = vsel %vm77, 1, 0
    %v94 = vsel %vm78, 1, 0
    %v95 = vsel %vm79, 1, 0
    %v96 = vsel %vm80, 1, 0
    %v97 = vsel %vm81, 1, 0
    %v98 = vsel %vm82, 1, 0
    %v99 = vcvt.s32.f32 %v83
    %v100 = vcvt.s32.f32 %v84
    %v101 = vcvt.s32.f32 %v85
    %v102 = vcvt.s32.f32 %v86
    %v103 = vcvt.s32.f32 %v87
    %v104 = vcvt.s32.f32 %v88
    %v105 = vcvt.s32.f32 %v89
    %v106 = vcvt.s32.f32 %v90
    %v107 = vcvt.s32.f32 %v91
    %v108 = vcvt.s32.f32 %v92
    %v109 = vcvt.s32.f32 %v93
    %v110 = vcvt.s32.f32 %v94
    %v111 = vcvt.s32.f32 %v95
    %v112 = vcvt.s32.f32 %v96
    %v113 = vcvt.s32.f32 %v97
    %v114 = vcvt.s32.f32 %v98
    %115 = vmatprep.subr.mxu0 0.0
    %116 = vmatpush1.xpose.msra.mxu0 %v114
    %117 = vmatprep.subr.mxu0 0.0
    %118 = vmatpush1.xpose.msra.mxu0 %v113
    %119 = vmatprep.subr.mxu0 0.0
    %120 = vmatpush1.xpose.msra.mxu0 %v112
    %121 = vmatprep.subr.mxu0 0.0
    %122 = vmatpush1.xpose.msra.mxu0 %v111
    %123 = vmatprep.subr.mxu0 0.0
    %124 = vmatpush1.xpose.msra.mxu0 %v110
    %125 = vmatprep.subr.mxu0 0.0
    %126 = vmatpush1.xpose.msra.mxu0 %v109
    %127 = vmatprep.subr.mxu0 0.0
    %128 = vmatpush1.xpose.msra.mxu0 %v108
    %129 = vmatprep.subr.mxu0 0.0
    %130 = vmatpush1.xpose.msra.mxu0 %v107
    %131 = vmatprep.subr.mxu0 0.0
    %132 = vmatpush1.xpose.msra.mxu0 %v106
    %133 = vmatprep.subr.mxu0 0.0
    %134 = vmatpush1.xpose.msra.mxu0 %v105
    %135 = vmatprep.subr.mxu0 0.0
    %136 = vmatpush1.xpose.msra.mxu0 %v104
    %137 = vmatprep.subr.mxu0 0.0
    %138 = vmatpush1.xpose.msra.mxu0 %v103
    %139 = vmatprep.subr.mxu0 0.0
    %140 = vmatpush1.xpose.msra.mxu0 %v102
    %141 = vmatprep.subr.mxu0 0.0
    %142 = vmatpush1.xpose.msra.mxu0 %v101
    %143 = vmatprep.subr.mxu0 0.0
    %144 = vmatpush1.xpose.msra.mxu0 %v100
    %145 = vmatprep.subr.mxu0 0.0
    %146 = vmatpush1.xpose.msra.mxu0 %v99
    %147 = vmatprep.subr.mxu0 0.0
    %148 = vmatpush2.xpose.msra.mxu0 0.0
    %149 = vmatprep.subr.mxu0 0.0
    %150 = vmatpush2.xpose.msra.mxu0 0.0
    %151 = vmatprep.subr.mxu0 0.0
    %152 = vmatpush2.xpose.msra.mxu0 0.0
    %153 = vmatprep.subr.mxu0 0.0
    %154 = vmatpush2.xpose.msra.mxu0 0.0
    %155 = vmatprep.subr.mxu0 0.0
    %156 = vmatpush2.xpose.msra.mxu0 0.0
    %157 = vmatprep.subr.mxu0 0.0
    %158 = vmatpush2.xpose.msra.mxu0 0.0
    %159 = vmatprep.subr.mxu0 0.0
    %160 = vmatpush2.xpose.msra.mxu0 0.0
    %161 = vmatprep.subr.mxu0 0.0
    %162 = vmatpush2.xpose.msra.mxu0 0.0
    %163 = vmatprep.subr.mxu0 0.0
    %164 = vmatpush2.xpose.msra.mxu0 0.0
    %165 = vmatprep.subr.mxu0 0.0
    %166 = vmatpush2.xpose.msra.mxu0 0.0
    %167 = vmatprep.subr.mxu0 0.0
    %168 = vmatpush2.xpose.msra.mxu0 0.0
    %169 = vmatprep.subr.mxu0 0.0
    %170 = vmatpush2.xpose.msra.mxu0 0.0
    %171 = vmatprep.subr.mxu0 0.0
    %172 = vmatpush2.xpose.msra.mxu0 0.0
    %173 = vmatprep.subr.mxu0 0.0
    %174 = vmatpush2.xpose.msra.mxu0 0.0
    %175 = vmatprep.subr.mxu0 0.0
    %176 = vmatpush2.xpose.msra.mxu0 0.0
    %177 = vmatprep.subr.mxu0 0.0
    %178 = vmatpush2.xpose.msra.mxu0 0.0
    %179 = vmatprep.mubr.f32.mxu0 0.0
    %180 = vmatmul.mubr.f32.gmra.mxu0 %v45
    %v181 = vpop.f32.mrf.mxu0
    %v182 = vadd.f32 0.0, %v181
    %v183 = vpop.f32.mrf.mxu0
    %184 = vdwg.mxu0
    %v185 = vld [vmem:[#allocation5] sm:$0x1]
    %v186 = vadd.f32 %v185, %v182
    %187 = vst [vmem:[#allocation5] sm:$0x1] %v186
    // Predicated region
    $region14: #{tpu_custom_call.1} parent=1 // pred_check
      _
    $region15: #{tpu_custom_call.1} parent=1 // pred_check_branch
      %189 = sbr.rel (0) target = $region17
    $region16: #{tpu_custom_call.1} parent=1 // pred_region
      %s191 = ssub.s32 128, 128
      %192 = vsyncadd [#allocation4], %s191
      %s194 = sshll.u32 [#allocation5], 4
      %s195 = int_to_ptr.vmem [resolvable:$true] %s194
      %197 = dma.vmem_to_hbm [thread:$0]  %s195, 128, %s1, [#allocation4]
    $region17: #{tpu_custom_call.1} parent=1 // pred_fallthru
      _
    // Predicated region
    $region18: #{tpu_custom_call.1} parent=1 // pred_check
      _
    $region19: #{tpu_custom_call.1} parent=1 // pred_check_branch
      %199 = sbr.rel (0) target = $region21
    $region20: #{tpu_custom_call.1} parent=1 // pred_region
      %200 = dma.done [#allocation4], 128
    $region21: #{tpu_custom_call.1} parent=1 // pred_fallthru
      _
    %201 = vsyncpa [#allocation3], 1
    %202 = vsyncpa [#allocation4], 1

</llo_original>
